<compile_context>
chip_gen: v7x
topology: tpu7x:2x2x1
jax: 0.10.0
libtpu: 0.0.40
codegen_flags: <defaults>
</compile_context>

<pallas_src>
import functools

import jax
import jax.numpy as jnp
from jax.experimental import pallas as pl
from jax.experimental.pallas import tpu as pltpu


def _leaky(x, slope=0.2):
    # slope in (0, 1)  =>  max(x, slope*x) == LeakyReLU(x); mul + max (2 VPU ops).
    return jnp.maximum(x, slope * x)


def miniconv_kernel(x_ref,
                    w1_ref, t1_ref,
                    w2_ref, t2_ref,
                    w3_ref,
                    mp_ref, mn_ref,
                    o_ref,
                    *, C3):
    # x_ref: (TB*L, C0) bf16 slab covering TB whole batch elements.
    x = x_ref[...]

    # --- Conv1d ks=1 (f -> C1): bf16 operands, f32 accumulate; BN scale folded
    #     into w1 on the host, only the per-channel shift remains here. --------
    h = jnp.dot(x, w1_ref[...], preferred_element_type=jnp.float32) + t1_ref[...]
    h = _leaky(h).astype(jnp.bfloat16)

    # --- Conv1d ks=1 (C1 -> C2); BN scale folded into w2 -----------------------
    h = jnp.dot(h, w2_ref[...], preferred_element_type=jnp.float32) + t2_ref[...]
    h = _leaky(h).astype(jnp.bfloat16)

    # --- Conv1d ks=3, padding=1 (C2 -> C3): one merged matmul over the 3 taps --
    # m = [ h@Wp | h@Wc | h@Wn ]  with  y[l] = Wp-tap[l-1] + Wc-tap[l] + Wn-tap[l+1]
    m = jnp.dot(h, w3_ref[...], preferred_element_type=jnp.float32)   # (M, 3*C3) f32
    m_p = m[:, 0 * C3:1 * C3]
    m_c = m[:, 1 * C3:2 * C3]
    m_n = m[:, 2 * C3:3 * C3]

    M = m_c.shape[0]
    # Host-precomputed 0/1 boundary masks (rows, 1): zero padding never leaks
    # across batch elements inside the fused slab, and the roll wraparound row
    # is killed.  Rolls run on the XLU slot; masks are a single VPU multiply.
    y = m_c
    y = y + mp_ref[...] * pltpu.roll(m_p, shift=1, axis=0)
    # next tap: roll by M-1 == roll by -1 (pltpu.roll requires non-negative shift)
    y = y + mn_ref[...] * pltpu.roll(m_n, shift=M - 1, axis=0)
    y = _leaky(y)

    o_ref[...] = y.astype(o_ref.dtype)


def _choose_batch_tile(b, L, rows_target=2048):
    """Batch elements per grid step.

    Aim for ~rows_target rows per step so the ~0.35 us/step pipeline overhead is
    well amortized; never force a split into tiny tiles (the old ">= 2 steps"
    megacore heuristic is gone -- multiple steps only appear when each step still
    carries ~rows_target rows, which is when v7x megacore sharding actually pays).
    When the grid has more than one step, the tiled block's first dimension
    (tb*L) must be a multiple of 16 (bf16 sublane packing); otherwise fall back
    to a single full-array step, which is always legal.
    """
    total = b * L
    if total <= rows_target:
        return b                                   # single step, whole input
    tb = max(1, rows_target // max(L, 1))
    tb = min(tb, b)
    while b % tb:                                  # tile must divide the batch
        tb -= 1
    # Enforce the sublane constraint for the multi-step case.
    while tb < b and (tb * L) % 16 != 0:
        tb += 1
        while tb < b and b % tb:
            tb += 1
    return min(tb, b)


def miniconv_mesh_forward(x, params):
    """x: (b, q, k, f) float32.  Returns (b, q, k, C3) float32."""
    b, q, k, f = x.shape
    L = q * k
    eps = 1e-5

    w1 = params["w1"]            # (C1, C0)
    w2 = params["w2"]            # (C2, C1)
    w3 = params["w3"]            # (C3, C2, 3)

    # Fold BatchNorm (eval mode, running stats) into the conv weights.
    s1 = params["g1"] / jnp.sqrt(params["rv1"] + eps)
    t1 = params["b1"] - params["rm1"] * s1
    s2 = params["g2"] / jnp.sqrt(params["rv2"] + eps)
    t2 = params["b2"] - params["rm2"] * s2

    C0, C1, C2, C3 = f, w1.shape[0], w2.shape[0], w3.shape[0]

    # bf16 matmul operands (f32 accumulation happens on the MXU inside the kernel).
    w1s = (w1.T * s1[None, :]).astype(jnp.bfloat16)                 # (C0, C1)
    w2s = (w2.T * s2[None, :]).astype(jnp.bfloat16)                 # (C1, C2)
    w3cat = jnp.concatenate(                                        # (C2, 3*C3)
        [w3[:, :, 0].T, w3[:, :, 1].T, w3[:, :, 2].T], axis=1).astype(jnp.bfloat16)
    t1r, t2r = t1.reshape(1, C1), t2.reshape(1, C2)                 # f32 shifts

    x_flat = x.reshape(b * L, f).astype(jnp.bfloat16)

    TB = _choose_batch_tile(b, L)
    rows = TB * L
    n_steps = b // TB

    # Host-precomputed ks=3 boundary masks; identical pattern on every grid step.
    pos = jnp.arange(rows, dtype=jnp.int32) % L
    mask_p = (pos > 0).astype(jnp.float32).reshape(rows, 1)
    mask_n = (pos < L - 1).astype(jnp.float32).reshape(rows, 1)

    full2d = lambda shape: pl.BlockSpec(shape, lambda i: (0, 0))

    kernel = functools.partial(miniconv_kernel, C3=C3)

    flops = 2 * b * L * (C0 * C1 + C1 * C2 + C2 * 3 * C3)
    bytes_accessed = int(
        x_flat.size * 2 + b * L * C3 * 4
        + (w1s.size + w2s.size + w3cat.size) * 2
        + (t1r.size + t2r.size) * 4
        + (mask_p.size + mask_n.size) * 4 * n_steps)

    out = pl.pallas_call(
        kernel,
        out_shape=jax.ShapeDtypeStruct((b * L, C3), jnp.float32),
        grid=(n_steps,),
        in_specs=[
            pl.BlockSpec((rows, C0), lambda i: (i, 0)),   # fused batch slab
            full2d((C0, C1)), full2d((1, C1)),
            full2d((C1, C2)), full2d((1, C2)),
            full2d((C2, 3 * C3)),
            full2d((rows, 1)), full2d((rows, 1)),         # boundary masks
        ],
        out_specs=pl.BlockSpec((rows, C3), lambda i: (i, 0)),
        compiler_params=pltpu.CompilerParams(
            dimension_semantics=("parallel",)),
        cost_estimate=pl.CostEstimate(flops=flops, transcendentals=0,
                                      bytes_accessed=bytes_accessed),
    )(x_flat, w1s, t1r, w2s, t2r, w3cat, mask_p, mask_n)

    return out.reshape(b, q, k, C3)


def reference_forward(x, params, matmul_dtype=jnp.float32):
    """Pure-JAX reference mirroring the PyTorch eval-mode forward.

    matmul_dtype=jnp.bfloat16 reproduces the kernel's precision choices (bf16
    matmul operands, f32 accumulation and f32 element-wise math); float32 gives
    the exact PyTorch-equivalent forward.
    """
    b, q, k, f = x.shape
    L = q * k
    eps = 1e-5

    s1 = params["g1"] / jnp.sqrt(params["rv1"] + eps)
    t1 = params["b1"] - params["rm1"] * s1
    s2 = params["g2"] / jnp.sqrt(params["rv2"] + eps)
    t2 = params["b2"] - params["rm2"] * s2

    w1 = (params["w1"].T * s1[None, :]).astype(matmul_dtype)
    w2 = (params["w2"].T * s2[None, :]).astype(matmul_dtype)
    w3 = params["w3"].astype(matmul_dtype)

    h = x.reshape(b, L, f).astype(matmul_dtype)
    h = _leaky(jnp.dot(h, w1, preferred_element_type=jnp.float32) + t1)
    h = _leaky(jnp.dot(h.astype(matmul_dtype), w2,
                       preferred_element_type=jnp.float32) + t2)
    h = h.astype(matmul_dtype)

    hp = jnp.pad(h, ((0, 0), (1, 1), (0, 0)))
    y = (jnp.dot(hp[:, :-2], w3[:, :, 0].T, preferred_element_type=jnp.float32)
         + jnp.dot(hp[:, 1:-1], w3[:, :, 1].T, preferred_element_type=jnp.float32)
         + jnp.dot(hp[:, 2:], w3[:, :, 2].T, preferred_element_type=jnp.float32))
    y = _leaky(y)
    return y.reshape(b, q, k, -1)


def init_params(key, layer_sizes):
    C0, C1, C2, C3 = layer_sizes
    ks = jax.random.split(key, 12)
    return {
        "w1": 0.1 * jax.random.normal(ks[0], (C1, C0), jnp.float32),
        "g1": 1.0 + 0.1 * jax.random.normal(ks[1], (C1,), jnp.float32),
        "b1": 0.1 * jax.random.normal(ks[2], (C1,), jnp.float32),
        "rm1": 0.1 * jax.random.normal(ks[3], (C1,), jnp.float32),
        "rv1": 0.5 + jnp.abs(jax.random.normal(ks[4], (C1,), jnp.float32)),
        "w2": 0.1 * jax.random.normal(ks[5], (C2, C1), jnp.float32),
        "g2": 1.0 + 0.1 * jax.random.normal(ks[6], (C2,), jnp.float32),
        "b2": 0.1 * jax.random.normal(ks[7], (C2,), jnp.float32),
        "rm2": 0.1 * jax.random.normal(ks[8], (C2,), jnp.float32),
        "rv2": 0.5 + jnp.abs(jax.random.normal(ks[9], (C2,), jnp.float32)),
        "w3": 0.1 * jax.random.normal(ks[10], (C3, C2, 3), jnp.float32),
    }


if __name__ == "__main__":
    key = jax.random.PRNGKey(0)
    k_x, k_p = jax.random.split(key)

    # Small shapes consistent with the module: layer_sizes = [f, C1, C2, C3].
    b, q, k_dim, f = 2, 4, 8, 8
    layer_sizes = [f, 32, 64, 16]

    x = jax.random.normal(k_x, (b, q, k_dim, f), jnp.float32)
    params = init_params(k_p, layer_sizes)

    y = miniconv_mesh_forward(x, params)
    y = jax.block_until_ready(y)
    assert y.shape == (b, q, k_dim, layer_sizes[3]), y.shape

    # Kernel-logic check: precision-matched (bf16 operands, f32 accumulate)
    # reference must agree tightly.
    y_bf16_ref = reference_forward(x, params, matmul_dtype=jnp.bfloat16)
    assert jnp.allclose(y, y_bf16_ref, atol=1e-4, rtol=1e-4), \
        float(jnp.max(jnp.abs(y - y_bf16_ref)))

    # Semantics check vs. the full-f32 PyTorch-equivalent forward; bf16 input
    # rounding is the dominant (and only) error term.
    y_f32_ref = reference_forward(x, params, matmul_dtype=jnp.float32)
    assert jnp.allclose(y, y_f32_ref, atol=5e-2, rtol=5e-2), \
        float(jnp.max(jnp.abs(y - y_f32_ref)))

    print("KERNEL_OK")
</pallas_src>

<mosaic_0001>
module attributes {stable_mosaic.version = 11 : i64} {
  func.func @miniconv_kernel(%arg0: i32, %arg1: memref<64x8xbf16, #tpu.memory_space<vmem>>, %arg2: memref<8x32xbf16, #tpu.memory_space<vmem>>, %arg3: memref<1x32xf32, #tpu.memory_space<vmem>>, %arg4: memref<32x64xbf16, #tpu.memory_space<vmem>>, %arg5: memref<1x64xf32, #tpu.memory_space<vmem>>, %arg6: memref<64x48xbf16, #tpu.memory_space<vmem>>, %arg7: memref<64x1xf32, #tpu.memory_space<vmem>>, %arg8: memref<64x1xf32, #tpu.memory_space<vmem>>, %arg9: memref<64x16xf32, #tpu.memory_space<vmem>>) attributes {dimension_semantics = [#tpu.dimension_semantics<parallel>], iteration_bounds = array<i64: 1>, scalar_prefetch = 0 : i64, scratch_operands = 0 : i64, tpu.core_type = #tpu.core_type<tc>, window_params = [{transform_indices = @transform_0, window_bounds = array<i64: 64, 8>}, {pipeline_mode = #tpu.pipeline_mode<synchronous>, transform_indices = @transform_1, window_bounds = array<i64: 8, 32>}, {pipeline_mode = #tpu.pipeline_mode<synchronous>, transform_indices = @transform_2, window_bounds = array<i64: 1, 32>}, {pipeline_mode = #tpu.pipeline_mode<synchronous>, transform_indices = @transform_3, window_bounds = array<i64: 32, 64>}, {pipeline_mode = #tpu.pipeline_mode<synchronous>, transform_indices = @transform_4, window_bounds = array<i64: 1, 64>}, {pipeline_mode = #tpu.pipeline_mode<synchronous>, transform_indices = @transform_5, window_bounds = array<i64: 64, 48>}, {pipeline_mode = #tpu.pipeline_mode<synchronous>, transform_indices = @transform_6, window_bounds = array<i64: 64, 1>}, {pipeline_mode = #tpu.pipeline_mode<synchronous>, transform_indices = @transform_7, window_bounds = array<i64: 64, 1>}, {transform_indices = @transform_8, window_bounds = array<i64: 64, 16>}]} {
    %c0 = arith.constant 0 : index
    %c0_0 = arith.constant 0 : index
    %0 = vector.load %arg1[%c0, %c0_0] : memref<64x8xbf16, #tpu.memory_space<vmem>>, vector<64x8xbf16>
    %c0_1 = arith.constant 0 : index
    %c0_2 = arith.constant 0 : index
    %1 = vector.load %arg2[%c0_1, %c0_2] : memref<8x32xbf16, #tpu.memory_space<vmem>>, vector<8x32xbf16>
    %cst = arith.constant dense<0.000000e+00> : vector<64x32xf32>
    %2 = tpu.matmul %0, %1, %cst {dimension_numbers = #tpu.dot_dimension_numbers<[1], [0], [0], [1], [0, 0, 1, 1], [], []>} : vector<64x8xbf16>, vector<8x32xbf16>, vector<64x32xf32> -> vector<64x32xf32>
    %c0_3 = arith.constant 0 : index
    %c0_4 = arith.constant 0 : index
    %3 = vector.load %arg3[%c0_3, %c0_4] : memref<1x32xf32, #tpu.memory_space<vmem>>, vector<1x32xf32>
    %4 = vector.broadcast %3 : vector<1x32xf32> to vector<64x32xf32>
    %5 = arith.addf %2, %4 : vector<64x32xf32>
    %cst_5 = arith.constant 2.000000e-01 : f32
    %6 = vector.broadcast %cst_5 : f32 to vector<64x32xf32>
    %7 = arith.mulf %6, %5 : vector<64x32xf32>
    %8 = arith.maximumf %5, %7 : vector<64x32xf32>
    %9 = arith.truncf %8 : vector<64x32xf32> to vector<64x32xbf16>
    %c0_6 = arith.constant 0 : index
    %c0_7 = arith.constant 0 : index
    %10 = vector.load %arg4[%c0_6, %c0_7] : memref<32x64xbf16, #tpu.memory_space<vmem>>, vector<32x64xbf16>
    %cst_8 = arith.constant dense<0.000000e+00> : vector<64x64xf32>
    %11 = tpu.matmul %9, %10, %cst_8 {dimension_numbers = #tpu.dot_dimension_numbers<[1], [0], [0], [1], [0, 0, 1, 1], [], []>} : vector<64x32xbf16>, vector<32x64xbf16>, vector<64x64xf32> -> vector<64x64xf32>
    %c0_9 = arith.constant 0 : index
    %c0_10 = arith.constant 0 : index
    %12 = vector.load %arg5[%c0_9, %c0_10] : memref<1x64xf32, #tpu.memory_space<vmem>>, vector<1x64xf32>
    %13 = vector.broadcast %12 : vector<1x64xf32> to vector<64x64xf32>
    %14 = arith.addf %11, %13 : vector<64x64xf32>
    %cst_11 = arith.constant 2.000000e-01 : f32
    %15 = vector.broadcast %cst_11 : f32 to vector<64x64xf32>
    %16 = arith.mulf %15, %14 : vector<64x64xf32>
    %17 = arith.maximumf %14, %16 : vector<64x64xf32>
    %18 = arith.truncf %17 : vector<64x64xf32> to vector<64x64xbf16>
    %c0_12 = arith.constant 0 : index
    %c0_13 = arith.constant 0 : index
    %19 = vector.load %arg6[%c0_12, %c0_13] : memref<64x48xbf16, #tpu.memory_space<vmem>>, vector<64x48xbf16>
    %cst_14 = arith.constant dense<0.000000e+00> : vector<64x48xf32>
    %20 = tpu.matmul %18, %19, %cst_14 {dimension_numbers = #tpu.dot_dimension_numbers<[1], [0], [0], [1], [0, 0, 1, 1], [], []>} : vector<64x64xbf16>, vector<64x48xbf16>, vector<64x48xf32> -> vector<64x48xf32>
    %21 = vector.extract_strided_slice %20 {offsets = [0, 0], sizes = [64, 16], strides = [1, 1]} : vector<64x48xf32> to vector<64x16xf32>
    %22 = vector.extract_strided_slice %20 {offsets = [0, 16], sizes = [64, 16], strides = [1, 1]} : vector<64x48xf32> to vector<64x16xf32>
    %23 = vector.extract_strided_slice %20 {offsets = [0, 32], sizes = [64, 16], strides = [1, 1]} : vector<64x48xf32> to vector<64x16xf32>
    %c0_15 = arith.constant 0 : index
    %c0_16 = arith.constant 0 : index
    %24 = vector.load %arg7[%c0_15, %c0_16] : memref<64x1xf32, #tpu.memory_space<vmem>>, vector<64x1xf32>
    %c1_i32 = arith.constant 1 : i32
    %25 = tpu.dynamic_rotate %21 by %c1_i32 dim 0 : vector<64x16xf32>, i32 -> vector<64x16xf32>
    %26 = vector.broadcast %24 : vector<64x1xf32> to vector<64x16xf32>
    %27 = arith.mulf %26, %25 : vector<64x16xf32>
    %28 = arith.addf %22, %27 : vector<64x16xf32>
    %c0_17 = arith.constant 0 : index
    %c0_18 = arith.constant 0 : index
    %29 = vector.load %arg8[%c0_17, %c0_18] : memref<64x1xf32, #tpu.memory_space<vmem>>, vector<64x1xf32>
    %c63_i32 = arith.constant 63 : i32
    %30 = tpu.dynamic_rotate %23 by %c63_i32 dim 0 : vector<64x16xf32>, i32 -> vector<64x16xf32>
    %31 = vector.broadcast %29 : vector<64x1xf32> to vector<64x16xf32>
    %32 = arith.mulf %31, %30 : vector<64x16xf32>
    %33 = arith.addf %28, %32 : vector<64x16xf32>
    %cst_19 = arith.constant 2.000000e-01 : f32
    %34 = vector.broadcast %cst_19 : f32 to vector<64x16xf32>
    %35 = arith.mulf %34, %33 : vector<64x16xf32>
    %36 = arith.maximumf %33, %35 : vector<64x16xf32>
    %c0_20 = arith.constant 0 : index
    %c0_21 = arith.constant 0 : index
    %37 = vector.load %arg9[%c0_20, %c0_21] : memref<64x16xf32, #tpu.memory_space<vmem>>, vector<64x16xf32>
    tpu.vector_store %arg9[%c0_20, %c0_21], %36 {strides = array<i32>} : memref<64x16xf32, #tpu.memory_space<vmem>>, vector<64x16xf32>,
    return
  }
  func.func @transform_0(%arg0: i32) -> (i32, i32) {
    %c0_i32 = arith.constant 0 : i32
    %c0_i32_0 = arith.constant 0 : i32
    return %arg0, %c0_i32 : i32, i32
  }
  func.func @transform_1(%arg0: i32) -> (i32, i32) {
    %c0_i32 = arith.constant 0 : i32
    %c0_i32_0 = arith.constant 0 : i32
    %c0_i32_1 = arith.constant 0 : i32
    return %c0_i32, %c0_i32_0 : i32, i32
  }
  func.func @transform_2(%arg0: i32) -> (i32, i32) {
    %c0_i32 = arith.constant 0 : i32
    %c0_i32_0 = arith.constant 0 : i32
    %c0_i32_1 = arith.constant 0 : i32
    return %c0_i32, %c0_i32_0 : i32, i32
  }
  func.func @transform_3(%arg0: i32) -> (i32, i32) {
    %c0_i32 = arith.constant 0 : i32
    %c0_i32_0 = arith.constant 0 : i32
    %c0_i32_1 = arith.constant 0 : i32
    return %c0_i32, %c0_i32_0 : i32, i32
  }
  func.func @transform_4(%arg0: i32) -> (i32, i32) {
    %c0_i32 = arith.constant 0 : i32
    %c0_i32_0 = arith.constant 0 : i32
    %c0_i32_1 = arith.constant 0 : i32
    return %c0_i32, %c0_i32_0 : i32, i32
  }
  func.func @transform_5(%arg0: i32) -> (i32, i32) {
    %c0_i32 = arith.constant 0 : i32
    %c0_i32_0 = arith.constant 0 : i32
    %c0_i32_1 = arith.constant 0 : i32
    return %c0_i32, %c0_i32_0 : i32, i32
  }
  func.func @transform_6(%arg0: i32) -> (i32, i32) {
    %c0_i32 = arith.constant 0 : i32
    %c0_i32_0 = arith.constant 0 : i32
    %c0_i32_1 = arith.constant 0 : i32
    return %c0_i32, %c0_i32_0 : i32, i32
  }
  func.func @transform_7(%arg0: i32) -> (i32, i32) {
    %c0_i32 = arith.constant 0 : i32
    %c0_i32_0 = arith.constant 0 : i32
    %c0_i32_1 = arith.constant 0 : i32
    return %c0_i32, %c0_i32_0 : i32, i32
  }
  func.func @transform_8(%arg0: i32) -> (i32, i32) {
    %c0_i32 = arith.constant 0 : i32
    %c0_i32_0 = arith.constant 0 : i32
    return %arg0, %c0_i32 : i32, i32
  }
}

</mosaic_0001>

<llo_original>
// kernel: tpu_custom_call.1
$region0: #{tpu_custom_call.1}
  #allocation0 [shape = 'u32[]', space=smem, size = 0x4, offset = 0x4, fixed_abs, tag = 'smem constant byte address 0x4 - core index']
  #allocation1 [shape = 'u32[144,128]{1,0:T(1,128)}', space=vmem, size = 0x12000, scoped, tag = 'internal scratch']
  %s0 = inlined_call_operand.vmem [shape: bf16[64,8], index: 0, kind: input, shape index: {}]
  %s1 = inlined_call_operand.vmem [shape: bf16[8,32], index: 1, kind: input, shape index: {}]
  %s2 = inlined_call_operand.vmem [shape: f32[1,32], index: 2, kind: input, shape index: {}]
  %s3 = inlined_call_operand.vmem [shape: bf16[32,64], index: 3, kind: input, shape index: {}]
  %s4 = inlined_call_operand.vmem [shape: f32[1,64], index: 4, kind: input, shape index: {}]
  %s5 = inlined_call_operand.vmem [shape: bf16[64,48], index: 5, kind: input, shape index: {}]
  %s6 = inlined_call_operand.vmem [shape: f32[64,1], index: 6, kind: input, shape index: {}]
  %s7 = inlined_call_operand.vmem [shape: f32[64,1], index: 7, kind: input, shape index: {}]
  %s8 = inlined_call_operand.vmem [shape: f32[64,16], index: 8, kind: output, shape index: {}]
  %s9 = sld [smem:[#allocation0]]
  $region42: #{tpu_custom_call.1} parent=0
    _
  %s11 = ssub.s32 1, %s9
  %s12 = scalar_select 0, %s11, %s9
  // Predicated region
  $region2: #{tpu_custom_call.1} parent=0 // pred_check
    _
  $region3: #{tpu_custom_call.1} parent=0 // pred_check_branch
    %14 = sbr.rel (0) target = $region5
  $region4: #{tpu_custom_call.1} parent=0 // pred_region
    _
  $region5: #{tpu_custom_call.1} parent=0 // pred_fallthru
    _
  // Predicated region
  $region6: #{tpu_custom_call.1} parent=0 // pred_check
    _
  $region7: #{tpu_custom_call.1} parent=0 // pred_check_branch
    %16 = sbr.rel (0) target = $region9
  $region8: #{tpu_custom_call.1} parent=0 // pred_region
    _
  $region9: #{tpu_custom_call.1} parent=0 // pred_fallthru
    _
  // Predicated region
  $region10: #{tpu_custom_call.1} parent=0 // pred_check
    _
  $region11: #{tpu_custom_call.1} parent=0 // pred_check_branch
    %18 = sbr.rel (0) target = $region13
  $region12: #{tpu_custom_call.1} parent=0 // pred_region
    _
  $region13: #{tpu_custom_call.1} parent=0 // pred_fallthru
    _
  // Predicated region
  $region14: #{tpu_custom_call.1} parent=0 // pred_check
    _
  $region15: #{tpu_custom_call.1} parent=0 // pred_check_branch
    %20 = sbr.rel (0) target = $region17
  $region16: #{tpu_custom_call.1} parent=0 // pred_region
    _
  $region17: #{tpu_custom_call.1} parent=0 // pred_fallthru
    _
  // Predicated region
  $region18: #{tpu_custom_call.1} parent=0 // pred_check
    _
  $region19: #{tpu_custom_call.1} parent=0 // pred_check_branch
    %22 = sbr.rel (0) target = $region21
  $region20: #{tpu_custom_call.1} parent=0 // pred_region
    _
  $region21: #{tpu_custom_call.1} parent=0 // pred_fallthru
    _
  // Predicated region
  $region22: #{tpu_custom_call.1} parent=0 // pred_check
    _
  $region23: #{tpu_custom_call.1} parent=0 // pred_check_branch
    %24 = sbr.rel (0) target = $region25
  $region24: #{tpu_custom_call.1} parent=0 // pred_region
    _
  $region25: #{tpu_custom_call.1} parent=0 // pred_fallthru
    _
  // Predicated region
  $region26: #{tpu_custom_call.1} parent=0 // pred_check
    _
  $region27: #{tpu_custom_call.1} parent=0 // pred_check_branch
    %26 = sbr.rel (0) target = $region29
  $region28: #{tpu_custom_call.1} parent=0 // pred_region
    _
  $region29: #{tpu_custom_call.1} parent=0 // pred_fallthru
    _
  // Predicated region
  $region30: #{tpu_custom_call.1} parent=0 // pred_check
    _
  $region31: #{tpu_custom_call.1} parent=0 // pred_check_branch
    %28 = sbr.rel (0) target = $region33
  $region32: #{tpu_custom_call.1} parent=0 // pred_region
    _
  $region33: #{tpu_custom_call.1} parent=0 // pred_fallthru
    _
  %v30 = vld [vmem:[%s0] sm:$0xf]
  %v31 = vld [vmem:[%s0 + $0x4] sm:$0xf]
  %v32 = vld [vmem:[%s0 + $0x8] sm:$0xf]
  %v33 = vld [vmem:[%s0 + $0xc] sm:$0xf]
  %v34 = vld [vmem:[%s0 + $0x10] sm:$0xf]
  %v35 = vld [vmem:[%s0 + $0x14] sm:$0xf]
  %v36 = vld [vmem:[%s0 + $0x18] sm:$0xf]
  %v37 = vld [vmem:[%s0 + $0x1c] sm:$0xf]
  %v38 = vld [vmem:[%s1] sm:$0xf]
  %v39 = vld [vmem:[%s2] sm:$0x1]
  %v41 = vlaneseq
  %v42 = vshrl.u32 %v41, 7
  %v43 = vsub.s32 0, %v42
  %v44 = vrot.slane %v39, %v43
  %v54 = vunpack.c.l.b16 %v30
  %v55 = vunpack.c.l.b16 %v31
  %v56 = vunpack.c.l.b16 %v32
  %v57 = vunpack.c.l.b16 %v33
  %v58 = vunpack.c.l.b16 %v34
  %v59 = vunpack.c.l.b16 %v35
  %v60 = vunpack.c.l.b16 %v36
  %v61 = vunpack.c.l.b16 %v37
  %v62 = vpack.c.b16 %v55, %v54
  %v63 = vpack.c.b16 %v57, %v56
  %v64 = vpack.c.b16 %v59, %v58
  %v65 = vpack.c.b16 %v61, %v60
  %vm66 = vcmask 64512
  %v68 = vsel %vm66, %v62, 0
  %v71 = vsel %vm66, %v63, 0
  %v74 = vsel %vm66, %v64, 0
  %v77 = vsel %vm66, %v65, 0
  %vm79 = vcmask 1043456
  %v81 = vsel %vm79, %v38, 0
  %83 = vmatprep.subr.bf16.mxu0 0
  %84 = vmatpush1.bf16.msra.mxu0 %v81
  %85 = vmatprep.subr.bf16.mxu0 0
  %86 = vmatpush1.bf16.msra.mxu0 0
  %87 = vmatprep.subr.bf16.mxu0 0
  %88 = vmatpush1.bf16.msra.mxu0 0
  %89 = vmatprep.subr.bf16.mxu0 0
  %90 = vmatpush1.bf16.msra.mxu0 0
  %91 = vmatprep.subr.bf16.mxu0 0
  %92 = vmatpush1.bf16.msra.mxu0 0
  %93 = vmatprep.subr.bf16.mxu0 0
  %94 = vmatpush1.bf16.msra.mxu0 0
  %95 = vmatprep.subr.bf16.mxu0 0
  %96 = vmatpush1.bf16.msra.mxu0 0
  %97 = vmatprep.subr.bf16.mxu0 0
  %98 = vmatpush1.bf16.msra.mxu0 0
  %99 = vmatprep.subr.bf16.mxu0 0
  %100 = vmatpush1.bf16.msra.mxu0 0
  %101 = vmatprep.subr.bf16.mxu0 0
  %102 = vmatpush1.bf16.msra.mxu0 0
  %103 = vmatprep.subr.bf16.mxu0 0
  %104 = vmatpush1.bf16.msra.mxu0 0
  %105 = vmatprep.subr.bf16.mxu0 0
  %106 = vmatpush1.bf16.msra.mxu0 0
  %107 = vmatprep.subr.bf16.mxu0 0
  %108 = vmatpush1.bf16.msra.mxu0 0
  %109 = vmatprep.subr.bf16.mxu0 0
  %110 = vmatpush1.bf16.msra.mxu0 0
  %111 = vmatprep.subr.bf16.mxu0 0
  %112 = vmatpush1.bf16.msra.mxu0 0
  %113 = vmatprep.subr.bf16.mxu0 0
  %114 = vmatpush1.bf16.msra.mxu0 0
  %115 = vmatprep.mubr.bf16.mxu0 0
  %116 = vmatmul.mubr.bf16.gmra.mrb[0].mxu0 %v68
  %v117 = vpop.f32.mrb[0].mxu0
  %v118 = vadd.f32 %v44, %v117
  %v119 = vpop.f32.mrb[0].mxu0
  %v120 = vpop.f32.mrb[0].mxu0
  %v121 = vadd.f32 %v44, %v120
  %v122 = vpop.f32.mrb[0].mxu0
  %123 = vmatprep.mubr.bf16.mxu0 0
  %124 = vmatmul.mubr.bf16.gmra.mrb[0].mxu0 %v71
  %v125 = vpop.f32.mrb[0].mxu0
  %v126 = vadd.f32 %v44, %v125
  %v127 = vpop.f32.mrb[0].mxu0
  %v128 = vpop.f32.mrb[0].mxu0
  %v129 = vadd.f32 %v44, %v128
  %v130 = vpop.f32.mrb[0].mxu0
  %131 = vmatprep.mubr.bf16.mxu0 0
  %132 = vmatmul.mubr.bf16.gmra.mrb[0].mxu0 %v74
  %v133 = vpop.f32.mrb[0].mxu0
  %v134 = vadd.f32 %v44, %v133
  %v135 = vpop.f32.mrb[0].mxu0
  %v136 = vpop.f32.mrb[0].mxu0
  %v137 = vadd.f32 %v44, %v136
  %v138 = vpop.f32.mrb[0].mxu0
  %139 = vmatprep.mubr.bf16.mxu0 0
  %140 = vmatmul.mubr.bf16.gmra.mrb[0].mxu0 %v77
  %v141 = vpop.f32.mrb[0].mxu0
  %v142 = vadd.f32 %v44, %v141
  %v143 = vpop.f32.mrb[0].mxu0
  %v144 = vpop.f32.mrb[0].mxu0
  %v145 = vadd.f32 %v44, %v144
  %v146 = vpop.f32.mrb[0].mxu0
  %147 = vdwg.mxu0
  %v148 = vmul.f32 %v118, 0.2
  %v149 = vmul.f32 %v121, 0.2
  %v150 = vmul.f32 %v126, 0.2
  %v151 = vmul.f32 %v129, 0.2
  %v152 = vmul.f32 %v134, 0.2
  %v153 = vmul.f32 %v137, 0.2
  %v154 = vmul.f32 %v142, 0.2
  %v155 = vmul.f32 %v145, 0.2
  %v156 = vmax.f32 %v118, %v148
  %v157 = vmax.f32 %v121, %v149
  %v158 = vmax.f32 %v126, %v150
  %v159 = vmax.f32 %v129, %v151
  %v160 = vmax.f32 %v134, %v152
  %v161 = vmax.f32 %v137, %v153
  %v162 = vmax.f32 %v142, %v154
  %v163 = vmax.f32 %v145, %v155
  %v164 = vpack.c.bf16 %v157, %v156
  %v165 = vpack.c.bf16 %v159, %v158
  %v166 = vpack.c.bf16 %v161, %v160
  %v167 = vpack.c.bf16 %v163, %v162
  %v168 = vld [vmem:[%s3] sm:$0xf]
  %v169 = vld [vmem:[%s3 + $0x4] sm:$0xf]
  %v170 = vld [vmem:[%s3 + $0x8] sm:$0xf]
  %v171 = vld [vmem:[%s3 + $0xc] sm:$0xf]
  %v172 = vld [vmem:[%s4] sm:$0x1]
  %v174 = vlaneseq
  %v175 = vshrl.u32 %v174, 7
  %v176 = vsub.s32 0, %v175
  %v177 = vrot.slane %v172, %v176
  %v183 = vunpack.c.l.b16 %v168
  %v184 = vunpack.c.l.b16 %v169
  %v185 = vunpack.c.l.b16 %v170
  %v186 = vunpack.c.l.b16 %v171
  %v187 = vpack.c.b16 %v184, %v183
  %v188 = vpack.c.b16 %v186, %v185
  %vm191 = vcmask 261120
  %v193 = vsel %vm191, %v164, 0
  %v196 = vsel %vm191, %v165, 0
  %v199 = vsel %vm191, %v166, 0
  %v202 = vsel %vm191, %v167, 0
  %204 = vmatprep.subr.bf16.mxu0 0
  %205 = vmatpush1.bf16.msra.mxu0 %v187
  %206 = vmatprep.subr.bf16.mxu0 0
  %207 = vmatpush1.bf16.msra.mxu0 %v188
  %208 = vmatprep.subr.bf16.mxu0 0
  %209 = vmatpush1.bf16.msra.mxu0 0
  %210 = vmatprep.subr.bf16.mxu0 0
  %211 = vmatpush1.bf16.msra.mxu0 0
  %212 = vmatprep.subr.bf16.mxu0 0
  %213 = vmatpush1.bf16.msra.mxu0 0
  %214 = vmatprep.subr.bf16.mxu0 0
  %215 = vmatpush1.bf16.msra.mxu0 0
  %216 = vmatprep.subr.bf16.mxu0 0
  %217 = vmatpush1.bf16.msra.mxu0 0
  %218 = vmatprep.subr.bf16.mxu0 0
  %219 = vmatpush1.bf16.msra.mxu0 0
  %220 = vmatprep.subr.bf16.mxu0 0
  %221 = vmatpush1.bf16.msra.mxu0 0
  %222 = vmatprep.subr.bf16.mxu0 0
  %223 = vmatpush1.bf16.msra.mxu0 0
  %224 = vmatprep.subr.bf16.mxu0 0
  %225 = vmatpush1.bf16.msra.mxu0 0
  %226 = vmatprep.subr.bf16.mxu0 0
  %227 = vmatpush1.bf16.msra.mxu0 0
  %228 = vmatprep.subr.bf16.mxu0 0
  %229 = vmatpush1.bf16.msra.mxu0 0
  %230 = vmatprep.subr.bf16.mxu0 0
  %231 = vmatpush1.bf16.msra.mxu0 0
  %232 = vmatprep.subr.bf16.mxu0 0
  %233 = vmatpush1.bf16.msra.mxu0 0
  %234 = vmatprep.subr.bf16.mxu0 0
  %235 = vmatpush1.bf16.msra.mxu0 0
  %236 = vmatprep.mubr.bf16.mxu0 0
  %237 = vmatmul.mubr.bf16.gmra.mrb[0].mxu0 %v193
  %v238 = vpop.f32.mrb[0].mxu0
  %v239 = vadd.f32 %v177, %v238
  %v240 = vpop.f32.mrb[0].mxu0
  %v241 = vpop.f32.mrb[0].mxu0
  %v242 = vadd.f32 %v177, %v241
  %v243 = vpop.f32.mrb[0].mxu0
  %244 = vmatprep.mubr.bf16.mxu0 0
  %245 = vmatmul.mubr.bf16.gmra.mrb[0].mxu0 %v196
  %v246 = vpop.f32.mrb[0].mxu0
  %v247 = vadd.f32 %v177, %v246
  %v248 = vpop.f32.mrb[0].mxu0
  %v249 = vpop.f32.mrb[0].mxu0
  %v250 = vadd.f32 %v177, %v249
  %v251 = vpop.f32.mrb[0].mxu0
  %252 = vmatprep.mubr.bf16.mxu0 0
  %253 = vmatmul.mubr.bf16.gmra.mrb[0].mxu0 %v199
  %v254 = vpop.f32.mrb[0].mxu0
  %v255 = vadd.f32 %v177, %v254
  %v256 = vpop.f32.mrb[0].mxu0
  %v257 = vpop.f32.mrb[0].mxu0
  %v258 = vadd.f32 %v177, %v257
  %v259 = vpop.f32.mrb[0].mxu0
  %260 = vmatprep.mubr.bf16.mxu0 0
  %261 = vmatmul.mubr.bf16.gmra.mrb[0].mxu0 %v202
  %v262 = vpop.f32.mrb[0].mxu0
  %v263 = vadd.f32 %v177, %v262
  %v264 = vpop.f32.mrb[0].mxu0
  %v265 = vpop.f32.mrb[0].mxu0
  %v266 = vadd.f32 %v177, %v265
  %v267 = vpop.f32.mrb[0].mxu0
  %268 = vdwg.mxu0
  %v269 = vmul.f32 %v239, 0.2
  %v270 = vmul.f32 %v242, 0.2
  %v271 = vmul.f32 %v247, 0.2
  %v272 = vmul.f32 %v250, 0.2
  %v273 = vmul.f32 %v255, 0.2
  %v274 = vmul.f32 %v258, 0.2
  %v275 = vmul.f32 %v263, 0.2
  %v276 = vmul.f32 %v266, 0.2
  %v277 = vmax.f32 %v239, %v269
  %v278 = vmax.f32 %v242, %v270
  %v279 = vmax.f32 %v247, %v271
  %v280 = vmax.f32 %v250, %v272
  %v281 = vmax.f32 %v255, %v273
  %v282 = vmax.f32 %v258, %v274
  %v283 = vmax.f32 %v263, %v275
  %v284 = vmax.f32 %v266, %v276
  %v285 = vpack.c.bf16 %v278, %v277
  %v286 = vpack.c.bf16 %v280, %v279
  %v287 = vpack.c.bf16 %v282, %v281
  %v288 = vpack.c.bf16 %v284, %v283
  %v289 = vld [vmem:[%s5] sm:$0xf]
  %v290 = vld [vmem:[%s5 + $0x4] sm:$0xf]
  %v291 = vld [vmem:[%s5 + $0x8] sm:$0xf]
  %v292 = vld [vmem:[%s5 + $0xc] sm:$0xf]
  %v293 = vld [vmem:[%s5 + $0x10] sm:$0xf]
  %v294 = vld [vmem:[%s5 + $0x14] sm:$0xf]
  %v295 = vld [vmem:[%s5 + $0x18] sm:$0xf]
  %v296 = vld [vmem:[%s5 + $0x1c] sm:$0xf]
  %v305 = vunpack.c.l.b16 %v289
  %v306 = vunpack.c.l.b16 %v290
  %v307 = vunpack.c.l.b16 %v291
  %v308 = vunpack.c.l.b16 %v292
  %v309 = vunpack.c.l.b16 %v293
  %v310 = vunpack.c.l.b16 %v294
  %v311 = vunpack.c.l.b16 %v295
  %v312 = vunpack.c.l.b16 %v296
  %v313 = vpack.c.b16 %v306, %v305
  %v314 = vpack.c.b16 %v308, %v307
  %v315 = vpack.c.b16 %v310, %v309
  %v316 = vpack.c.b16 %v312, %v311
  %vm321 = vcmask 523264
  %v323 = vsel %vm321, %v285, 0
  %v326 = vsel %vm321, %v286, 0
  %v329 = vsel %vm321, %v287, 0
  %v332 = vsel %vm321, %v288, 0
  %334 = vmatprep.subr.bf16.mxu0 0
  %335 = vmatpush1.bf16.msra.mxu0 %v313
  %336 = vmatprep.subr.bf16.mxu0 0
  %337 = vmatpush1.bf16.msra.mxu0 %v314
  %338 = vmatprep.subr.bf16.mxu0 0
  %339 = vmatpush1.bf16.msra.mxu0 %v315
  %340 = vmatprep.subr.bf16.mxu0 0
  %341 = vmatpush1.bf16.msra.mxu0 %v316
  %342 = vmatprep.subr.bf16.mxu0 0
  %343 = vmatpush1.bf16.msra.mxu0 0
  %344 = vmatprep.subr.bf16.mxu0 0
  %345 = vmatpush1.bf16.msra.mxu0 0
  %346 = vmatprep.subr.bf16.mxu0 0
  %347 = vmatpush1.bf16.msra.mxu0 0
  %348 = vmatprep.subr.bf16.mxu0 0
  %349 = vmatpush1.bf16.msra.mxu0 0
  %350 = vmatprep.subr.bf16.mxu0 0
  %351 = vmatpush1.bf16.msra.mxu0 0
  %352 = vmatprep.subr.bf16.mxu0 0
  %353 = vmatpush1.bf16.msra.mxu0 0
  %354 = vmatprep.subr.bf16.mxu0 0
  %355 = vmatpush1.bf16.msra.mxu0 0
  %356 = vmatprep.subr.bf16.mxu0 0
  %357 = vmatpush1.bf16.msra.mxu0 0
  %358 = vmatprep.subr.bf16.mxu0 0
  %359 = vmatpush1.bf16.msra.mxu0 0
  %360 = vmatprep.subr.bf16.mxu0 0
  %361 = vmatpush1.bf16.msra.mxu0 0
  %362 = vmatprep.subr.bf16.mxu0 0
  %363 = vmatpush1.bf16.msra.mxu0 0
  %364 = vmatprep.subr.bf16.mxu0 0
  %365 = vmatpush1.bf16.msra.mxu0 0
  %366 = vmatprep.mubr.bf16.mxu0 0
  %367 = vmatmul.mubr.bf16.gmra.mrb[0].mxu0 %v323
  %v368 = vpop.f32.mrb[0].mxu0
  %v369 = vadd.f32 0.0, %v368
  %v370 = vpop.f32.mrb[0].mxu0
  %v371 = vpop.f32.mrb[0].mxu0
  %v372 = vadd.f32 0.0, %v371
  %v373 = vpop.f32.mrb[0].mxu0
  %374 = vmatprep.mubr.bf16.mxu0 0
  %375 = vmatmul.mubr.bf16.gmra.mrb[0].mxu0 %v326
  %v376 = vpop.f32.mrb[0].mxu0
  %v377 = vadd.f32 0.0, %v376
  %v378 = vpop.f32.mrb[0].mxu0
  %v379 = vpop.f32.mrb[0].mxu0
  %v380 = vadd.f32 0.0, %v379
  %v381 = vpop.f32.mrb[0].mxu0
  %382 = vmatprep.mubr.bf16.mxu0 0
  %383 = vmatmul.mubr.bf16.gmra.mrb[0].mxu0 %v329
  %v384 = vpop.f32.mrb[0].mxu0
  %v385 = vadd.f32 0.0, %v384
  %v386 = vpop.f32.mrb[0].mxu0
  %v387 = vpop.f32.mrb[0].mxu0
  %v388 = vadd.f32 0.0, %v387
  %v389 = vpop.f32.mrb[0].mxu0
  %390 = vmatprep.mubr.bf16.mxu0 0
  %391 = vmatmul.mubr.bf16.gmra.mrb[0].mxu0 %v332
  %v392 = vpop.f32.mrb[0].mxu0
  %v393 = vadd.f32 0.0, %v392
  %v394 = vpop.f32.mrb[0].mxu0
  %v395 = vpop.f32.mrb[0].mxu0
  %v396 = vadd.f32 0.0, %v395
  %v397 = vpop.f32.mrb[0].mxu0
  %398 = vdwg.mxu0
  %v399 = vld [vmem:[%s6] sm:$0xff]
  %v400 = vld [vmem:[%s6 + $0x8] sm:$0xff]
  %v401 = vld [vmem:[%s6 + $0x10] sm:$0xff]
  %v402 = vld [vmem:[%s6 + $0x18] sm:$0xff]
  %v403 = vld [vmem:[%s6 + $0x20] sm:$0xff]
  %v404 = vld [vmem:[%s6 + $0x28] sm:$0xff]
  %v405 = vld [vmem:[%s6 + $0x30] sm:$0xff]
  %v406 = vld [vmem:[%s6 + $0x38] sm:$0xff]
  %v407 = vrot.slane %v369, 7
  %v408 = vrot.slane %v372, 7
  %v409 = vrot.slane %v377, 7
  %v410 = vrot.slane %v380, 7
  %v411 = vrot.slane %v385, 7
  %v412 = vrot.slane %v388, 7
  %v413 = vrot.slane %v393, 7
  %v414 = vrot.slane %v396, 7
  %v415 = vlaneseq
  %v416 = vshrl.u32 %v415, 7
  %vm417 = vcmp.lt.s32.totalorder %v416, 1
  %v418 = vsel %vm417, %v413, %v414
  %v419 = vsel %vm417, %v412, %v413
  %v420 = vsel %vm417, %v411, %v412
  %v421 = vsel %vm417, %v410, %v411
  %v422 = vsel %vm417, %v409, %v410
  %v423 = vsel %vm417, %v408, %v409
  %v424 = vsel %vm417, %v407, %v408
  %v425 = vsel %vm417, %v414, %v407
  %427 = vset.pattern.permute.xlu0 0
  %428 = vperm.xlu0 %427, %v399
  %v429 = vpop.permute.xlu0 %428
  %432 = vset.pattern.permute.xlu0 0
  %433 = vperm.xlu0 %432, %v400
  %v434 = vpop.permute.xlu0 %433
  %437 = vset.pattern.permute.xlu0 0
  %438 = vperm.xlu0 %437, %v401
  %v439 = vpop.permute.xlu0 %438
  %442 = vset.pattern.permute.xlu0 0
  %443 = vperm.xlu0 %442, %v402
  %v444 = vpop.permute.xlu0 %443
  %447 = vset.pattern.permute.xlu0 0
  %448 = vperm.xlu0 %447, %v403
  %v449 = vpop.permute.xlu0 %448
  %452 = vset.pattern.permute.xlu0 0
  %453 = vperm.xlu0 %452, %v404
  %v454 = vpop.permute.xlu0 %453
  %457 = vset.pattern.permute.xlu0 0
  %458 = vperm.xlu0 %457, %v405
  %v459 = vpop.permute.xlu0 %458
  %462 = vset.pattern.permute.xlu0 0
  %463 = vperm.xlu0 %462, %v406
  %v464 = vpop.permute.xlu0 %463
  %v466 = vmul.f32 %v429, %v425
  %v467 = vmul.f32 %v434, %v424
  %v468 = vmul.f32 %v439, %v423
  %v469 = vmul.f32 %v444, %v422
  %v470 = vmul.f32 %v449, %v421
  %v471 = vmul.f32 %v454, %v420
  %v472 = vmul.f32 %v459, %v419
  %v473 = vmul.f32 %v464, %v418
  %482 = vrot.lane.b32.xlu0 %v466, 16
  %v483 = vpop.permute.xlu0 %482
  %484 = vrot.lane.b32.xlu0 %v467, 16
  %v485 = vpop.permute.xlu0 %484
  %486 = vrot.lane.b32.xlu0 %v468, 16
  %v487 = vpop.permute.xlu0 %486
  %488 = vrot.lane.b32.xlu0 %v469, 16
  %v489 = vpop.permute.xlu0 %488
  %490 = vrot.lane.b32.xlu0 %v470, 16
  %v491 = vpop.permute.xlu0 %490
  %492 = vrot.lane.b32.xlu0 %v471, 16
  %v493 = vpop.permute.xlu0 %492
  %494 = vrot.lane.b32.xlu0 %v472, 16
  %v495 = vpop.permute.xlu0 %494
  %496 = vrot.lane.b32.xlu0 %v473, 16
  %v497 = vpop.permute.xlu0 %496
  %v506 = vadd.f32 %v369, %v483
  %v507 = vadd.f32 %v372, %v485
  %v508 = vadd.f32 %v377, %v487
  %v509 = vadd.f32 %v380, %v489
  %v510 = vadd.f32 %v385, %v491
  %v511 = vadd.f32 %v388, %v493
  %v512 = vadd.f32 %v393, %v495
  %v513 = vadd.f32 %v396, %v497
  %v514 = vld [vmem:[%s7] sm:$0xff]
  %v515 = vld [vmem:[%s7 + $0x8] sm:$0xff]
  %v516 = vld [vmem:[%s7 + $0x10] sm:$0xff]
  %v517 = vld [vmem:[%s7 + $0x18] sm:$0xff]
  %v518 = vld [vmem:[%s7 + $0x20] sm:$0xff]
  %v519 = vld [vmem:[%s7 + $0x28] sm:$0xff]
  %v520 = vld [vmem:[%s7 + $0x30] sm:$0xff]
  %v521 = vld [vmem:[%s7 + $0x38] sm:$0xff]
  %530 = vrot.lane.b32.xlu0 %v369, 96
  %v531 = vpop.permute.xlu0 %530
  %532 = vrot.lane.b32.xlu0 %v372, 96
  %v533 = vpop.permute.xlu0 %532
  %534 = vrot.lane.b32.xlu0 %v377, 96
  %v535 = vpop.permute.xlu0 %534
  %536 = vrot.lane.b32.xlu0 %v380, 96
  %v537 = vpop.permute.xlu0 %536
  %538 = vrot.lane.b32.xlu0 %v385, 96
  %v539 = vpop.permute.xlu0 %538
  %540 = vrot.lane.b32.xlu0 %v388, 96
  %v541 = vpop.permute.xlu0 %540
  %542 = vrot.lane.b32.xlu0 %v393, 96
  %v543 = vpop.permute.xlu0 %542
  %544 = vrot.lane.b32.xlu0 %v396, 96
  %v545 = vpop.permute.xlu0 %544
  %v554 = vrot.slane %v531, 1
  %v555 = vrot.slane %v533, 1
  %v556 = vrot.slane %v535, 1
  %v557 = vrot.slane %v537, 1
  %v558 = vrot.slane %v539, 1
  %v559 = vrot.slane %v541, 1
  %v560 = vrot.slane %v543, 1
  %v561 = vrot.slane %v545, 1
  %vm562 = vcmp.lt.s32.totalorder %v416, 7
  %v563 = vsel %vm562, %v560, %v561
  %v564 = vsel %vm562, %v559, %v560
  %v565 = vsel %vm562, %v558, %v559
  %v566 = vsel %vm562, %v557, %v558
  %v567 = vsel %vm562, %v556, %v557
  %v568 = vsel %vm562, %v555, %v556
  %v569 = vsel %vm562, %v554, %v555
  %v570 = vsel %vm562, %v561, %v554
  %572 = vset.pattern.permute.xlu0 0
  %573 = vperm.xlu0 %572, %v514
  %v574 = vpop.permute.xlu0 %573
  %577 = vset.pattern.permute.xlu0 0
  %578 = vperm.xlu0 %577, %v515
  %v579 = vpop.permute.xlu0 %578
  %582 = vset.pattern.permute.xlu0 0
  %583 = vperm.xlu0 %582, %v516
  %v584 = vpop.permute.xlu0 %583
  %587 = vset.pattern.permute.xlu0 0
  %588 = vperm.xlu0 %587, %v517
  %v589 = vpop.permute.xlu0 %588
  %592 = vset.pattern.permute.xlu0 0
  %593 = vperm.xlu0 %592, %v518
  %v594 = vpop.permute.xlu0 %593
  %597 = vset.pattern.permute.xlu0 0
  %598 = vperm.xlu0 %597, %v519
  %v599 = vpop.permute.xlu0 %598
  %602 = vset.pattern.permute.xlu0 0
  %603 = vperm.xlu0 %602, %v520
  %v604 = vpop.permute.xlu0 %603
  %607 = vset.pattern.permute.xlu0 0
  %608 = vperm.xlu0 %607, %v521
  %v609 = vpop.permute.xlu0 %608
  %v611 = vmul.f32 %v574, %v569
  %v612 = vmul.f32 %v579, %v568
  %v613 = vmul.f32 %v584, %v567
  %v614 = vmul.f32 %v589, %v566
  %v615 = vmul.f32 %v594, %v565
  %v616 = vmul.f32 %v599, %v564
  %v617 = vmul.f32 %v604, %v563
  %v618 = vmul.f32 %v609, %v570
  %627 = vrot.lane.b32.xlu0 %v611, 16
  %v628 = vpop.permute.xlu0 %627
  %629 = vrot.lane.b32.xlu0 %v612, 16
  %v630 = vpop.permute.xlu0 %629
  %631 = vrot.lane.b32.xlu0 %v613, 16
  %v632 = vpop.permute.xlu0 %631
  %633 = vrot.lane.b32.xlu0 %v614, 16
  %v634 = vpop.permute.xlu0 %633
  %635 = vrot.lane.b32.xlu0 %v615, 16
  %v636 = vpop.permute.xlu0 %635
  %637 = vrot.lane.b32.xlu0 %v616, 16
  %v638 = vpop.permute.xlu0 %637
  %639 = vrot.lane.b32.xlu0 %v617, 16
  %v640 = vpop.permute.xlu0 %639
  %641 = vrot.lane.b32.xlu0 %v618, 16
  %v642 = vpop.permute.xlu0 %641
  %v651 = vadd.f32 %v506, %v628
  %v652 = vadd.f32 %v507, %v630
  %v653 = vadd.f32 %v508, %v632
  %v654 = vadd.f32 %v509, %v634
  %v655 = vadd.f32 %v510, %v636
  %v656 = vadd.f32 %v511, %v638
  %v657 = vadd.f32 %v512, %v640
  %v658 = vadd.f32 %v513, %v642
  %v659 = vmul.f32 %v651, 0.2
  %v660 = vmul.f32 %v652, 0.2
  %v661 = vmul.f32 %v653, 0.2
  %v662 = vmul.f32 %v654, 0.2
  %v663 = vmul.f32 %v655, 0.2
  %v664 = vmul.f32 %v656, 0.2
  %v665 = vmul.f32 %v657, 0.2
  %v666 = vmul.f32 %v658, 0.2
  %v667 = vmax.f32 %v651, %v659
  %v668 = vmax.f32 %v652, %v660
  %v669 = vmax.f32 %v653, %v661
  %v670 = vmax.f32 %v654, %v662
  %v671 = vmax.f32 %v655, %v663
  %v672 = vmax.f32 %v656, %v664
  %v673 = vmax.f32 %v657, %v665
  %v674 = vmax.f32 %v658, %v666
  %683 = vrot.lane.b32.xlu0 %v667, 112
  %v684 = vpop.permute.xlu0 %683
  %685 = vrot.lane.b32.xlu0 %v668, 112
  %v686 = vpop.permute.xlu0 %685
  %687 = vrot.lane.b32.xlu0 %v669, 112
  %v688 = vpop.permute.xlu0 %687
  %689 = vrot.lane.b32.xlu0 %v670, 112
  %v690 = vpop.permute.xlu0 %689
  %691 = vrot.lane.b32.xlu0 %v671, 112
  %v692 = vpop.permute.xlu0 %691
  %693 = vrot.lane.b32.xlu0 %v672, 112
  %v694 = vpop.permute.xlu0 %693
  %695 = vrot.lane.b32.xlu0 %v673, 112
  %v696 = vpop.permute.xlu0 %695
  %697 = vrot.lane.b32.xlu0 %v674, 112
  %v698 = vpop.permute.xlu0 %697
  %vm707 = vcmask 130048
  %708 = vst.msk [vmem:[%s8] sm:$0xff] %vm707, %v684
  %709 = vst.msk [vmem:[%s8 + $0x8] sm:$0xff] %vm707, %v686
  %710 = vst.msk [vmem:[%s8 + $0x10] sm:$0xff] %vm707, %v688
  %711 = vst.msk [vmem:[%s8 + $0x18] sm:$0xff] %vm707, %v690
  %712 = vst.msk [vmem:[%s8 + $0x20] sm:$0xff] %vm707, %v692
  %713 = vst.msk [vmem:[%s8 + $0x28] sm:$0xff] %vm707, %v694
  %714 = vst.msk [vmem:[%s8 + $0x30] sm:$0xff] %vm707, %v696
  %715 = vst.msk [vmem:[%s8 + $0x38] sm:$0xff] %vm707, %v698
  // Predicated region
  $region34: #{tpu_custom_call.1} parent=0 // pred_check
    _
  $region35: #{tpu_custom_call.1} parent=0 // pred_check_branch
    %717 = sbr.rel (0) target = $region37
  $region36: #{tpu_custom_call.1} parent=0 // pred_region
    _
  $region37: #{tpu_custom_call.1} parent=0 // pred_fallthru
    _
  // Predicated region
  $region38: #{tpu_custom_call.1} parent=0 // pred_check
    _
  $region39: #{tpu_custom_call.1} parent=0 // pred_check_branch
    %719 = sbr.rel (0) target = $region41
  $region40: #{tpu_custom_call.1} parent=0 // pred_region
    _
  $region41: #{tpu_custom_call.1} parent=0 // pred_fallthru
    _

</llo_original>
